<compile_context>
chip_gen: v6e
topology: v6e:2x2x1
jax: 0.10.0
libtpu: 0.0.40
codegen_flags: <defaults>
</compile_context>

<pallas_src>
import math
import functools

import jax
import jax.numpy as jnp
from jax.experimental import pallas as pl
from jax.experimental.pallas import tpu as pltpu


def _softmax_kernel(x_ref, o_ref, *, inv_scale, transpose_out):
    """x_ref: (T, H, TW) input block; o_ref: (T, TW, H) or (T, H, TW)."""
    x = x_ref[...]                                     # lane-dense (T, H, TW)
    # Softmax over H (sublane axis) == softmax over the last dim of x^T.
    m = jnp.max(x, axis=1, keepdims=True)              # (T, 1, TW), raw max
    e = jnp.exp((x - m) * inv_scale)                   # fold 1/sqrt(C) into exp arg
    s = jnp.sum(e, axis=1, keepdims=True)              # (T, 1, TW)
    inv = pl.reciprocal(s, approx=True)                # EUP slot, reduced array only
    r = e * inv                                        # broadcast multiply on VPU
    if transpose_out:
        # Only taken when H % 128 == 0: output stays lane-dense after the
        # transpose, so stores remain unmasked.
        r = jnp.swapaxes(r, -1, -2)
    o_ref[...] = r.astype(o_ref.dtype)


def scalar_sdpa(x):
    """x: (B, C, H, W) float32 -> (B, C, W, H) float32."""
    B, C, H, W = x.shape
    N = B * C
    inv_scale = 1.0 / math.sqrt(C)                     # static: k.size(1) == C
    itemsize = x.dtype.itemsize

    # Collapse batch/channel into one axis (free reshape outside the kernel).
    xf = x.reshape(N, H, W)

    # Keep the in-kernel transpose only when it stays lane-dense.
    transpose_in_kernel = (H % 128 == 0)

    # ---- W-tiling guard: keep a single (H, TW) slab under ~4 MiB ----------
    max_slab_bytes = 4 << 20
    if H * W * itemsize > max_slab_bytes and W > 128:
        tw = max(128, ((max_slab_bytes // (H * itemsize)) // 128) * 128)
        tw = min(tw, W)
    else:
        tw = W                                         # full-extent last dim
    n_w = pl.cdiv(W, tw)
    slab_bytes = H * tw * itemsize

    # ---- N-tiling: ~2 MiB blocks, but prefer >= 8 grid steps --------------
    target_block_bytes = 2 << 20
    min_block_bytes = 512 << 10
    T = max(1, min(N, target_block_bytes // slab_bytes))
    # Shrink T for more pipeline steps (>= 4 per v7x TensorCore) as long as
    # blocks stay >= ~512 KiB; always leave >= 2 steps when there is work for
    # both TensorCores.
    while T > 1 and pl.cdiv(N, T) * n_w < 8:
        t_half = pl.cdiv(T, 2)
        if t_half * slab_bytes < min_block_bytes and pl.cdiv(N, T) * n_w >= 2:
            break
        T = t_half

    grid = (pl.cdiv(N, T), n_w)
    block_bytes = T * slab_bytes

    in_spec = pl.BlockSpec((T, H, tw), lambda i, j: (i, 0, j))
    if transpose_in_kernel:
        out_shape = jax.ShapeDtypeStruct((N, W, H), x.dtype)
        out_spec = pl.BlockSpec((T, tw, H), lambda i, j: (i, j, 0))
    else:
        out_shape = jax.ShapeDtypeStruct((N, H, W), x.dtype)
        out_spec = pl.BlockSpec((T, H, tw), lambda i, j: (i, 0, j))

    kernel = functools.partial(
        _softmax_kernel, inv_scale=inv_scale, transpose_out=transpose_in_kernel
    )

    cost = pl.CostEstimate(
        flops=int(5 * N * H * W),               # sub, mul, sum, mul + max tree
        transcendentals=int(N * H * W),         # exp (plus cheap reciprocal)
        bytes_accessed=int(2 * N * H * W * itemsize),
    )

    out = pl.pallas_call(
        kernel,
        out_shape=out_shape,
        grid_spec=pltpu.PrefetchScalarGridSpec(
            num_scalar_prefetch=0,
            grid=grid,
            in_specs=[in_spec],
            out_specs=out_spec,
        ),
        compiler_params=pltpu.CompilerParams(
            dimension_semantics=("parallel", "parallel"),
            # 2 in + 2 out buffers of block_bytes each, with headroom; 32 MiB
            # is explicit so v5e (16 MiB scoped default) keeps double-buffering.
            vmem_limit_bytes=int(max(32 << 20, 4 * block_bytes + (4 << 20))),
        ),
        cost_estimate=cost,
    )(xf)

    if transpose_in_kernel:
        return out.reshape(B, C, W, H)
    # Lane-dense kernel output; produce the logical (W, H) view with a plain
    # XLA transpose outside the kernel (fuses with downstream consumers).
    return jnp.swapaxes(out.reshape(B, C, H, W), -2, -1)


def torch_reference(x):
    """Pure-JAX reference mirroring the PyTorch module semantics."""
    C = x.shape[1]
    scaled = jnp.swapaxes(x, -2, -1) / math.sqrt(C)    # q = 1.0
    attn = jax.nn.softmax(scaled, axis=-1)
    return attn * 1.0                                  # v = 1.0


if __name__ == "__main__":
    # Deterministic parameter from the module's __init__ (unused in forward).
    key_param = jnp.array(1.0, dtype=jnp.float32)      # self.key

    rng = jax.random.PRNGKey(0)

    # Case 1: H not a multiple of 128 -> lane-dense (N, H, W) store path.
    x1 = jax.random.normal(rng, (2, 4, 16, 128), dtype=jnp.float32)
    out1 = jax.block_until_ready(scalar_sdpa(x1))
    ref1 = torch_reference(x1)
    assert out1.shape == (2, 4, 128, 16), out1.shape
    assert jnp.allclose(out1, ref1, atol=1e-3, rtol=1e-3), "mismatch (case 1)"

    # Case 2: H % 128 == 0 -> in-kernel transpose path (still lane-dense).
    x2 = jax.random.normal(jax.random.PRNGKey(1), (2, 4, 128, 16), dtype=jnp.float32)
    out2 = jax.block_until_ready(scalar_sdpa(x2))
    ref2 = torch_reference(x2)
    assert out2.shape == (2, 4, 16, 128), out2.shape
    assert jnp.allclose(out2, ref2, atol=1e-3, rtol=1e-3), "mismatch (case 2)"

    print("KERNEL_OK")
</pallas_src>

<mosaic_0001>
module attributes {stable_mosaic.version = 11 : i64} {
  func.func @_softmax_kernel(%arg0: i32, %arg1: i32, %arg2: memref<4x16x128xf32, #tpu.memory_space<vmem>>, %arg3: memref<4x16x128xf32, #tpu.memory_space<vmem>>) attributes {dimension_semantics = [#tpu.dimension_semantics<parallel>, #tpu.dimension_semantics<parallel>], iteration_bounds = array<i64: 2, 1>, scalar_prefetch = 0 : i64, scratch_operands = 0 : i64, tpu.core_type = #tpu.core_type<tc>, window_params = [{transform_indices = @transform_0, window_bounds = array<i64: 4, 16, 128>}, {transform_indices = @transform_1, window_bounds = array<i64: 4, 16, 128>}]} {
    %c0 = arith.constant 0 : index
    %c0_0 = arith.constant 0 : index
    %c0_1 = arith.constant 0 : index
    %0 = vector.load %arg2[%c0, %c0_0, %c0_1] : memref<4x16x128xf32, #tpu.memory_space<vmem>>, vector<4x16x128xf32>
    %cst = arith.constant dense<0xFF800000> : vector<4x128xf32>
    %1 = vector.multi_reduction <maximumf>, %0, %cst [1] : vector<4x16x128xf32> to vector<4x128xf32>
    %2 = vector.shape_cast %1 : vector<4x128xf32> to vector<4x1x128xf32>
    %3 = vector.broadcast %2 : vector<4x1x128xf32> to vector<4x16x128xf32>
    %4 = arith.subf %0, %3 : vector<4x16x128xf32>
    %cst_2 = arith.constant 5.000000e-01 : f32
    %5 = vector.broadcast %cst_2 : f32 to vector<4x16x128xf32>
    %6 = arith.mulf %4, %5 : vector<4x16x128xf32>
    %7 = math.exp %6 : vector<4x16x128xf32>
    %cst_3 = arith.constant dense<0.000000e+00> : vector<4x128xf32>
    %8 = vector.multi_reduction <add>, %7, %cst_3 [1] : vector<4x16x128xf32> to vector<4x128xf32>
    %9 = vector.shape_cast %8 : vector<4x128xf32> to vector<4x1x128xf32>
    %10 = tpu.reciprocal %9 {approx = true} : vector<4x1x128xf32> -> vector<4x1x128xf32>
    %11 = vector.broadcast %10 : vector<4x1x128xf32> to vector<4x16x128xf32>
    %12 = arith.mulf %7, %11 : vector<4x16x128xf32>
    %c0_4 = arith.constant 0 : index
    %c0_5 = arith.constant 0 : index
    %c0_6 = arith.constant 0 : index
    %13 = vector.load %arg3[%c0_4, %c0_5, %c0_6] : memref<4x16x128xf32, #tpu.memory_space<vmem>>, vector<4x16x128xf32>
    tpu.vector_store %arg3[%c0_4, %c0_5, %c0_6], %12 {strides = array<i32>} : memref<4x16x128xf32, #tpu.memory_space<vmem>>, vector<4x16x128xf32>,
    return
  }
  func.func @transform_0(%arg0: i32, %arg1: i32) -> (i32, i32, i32) {
    %c0_i32 = arith.constant 0 : i32
    %c0_i32_0 = arith.constant 0 : i32
    return %arg0, %c0_i32, %arg1 : i32, i32, i32
  }
  func.func @transform_1(%arg0: i32, %arg1: i32) -> (i32, i32, i32) {
    %c0_i32 = arith.constant 0 : i32
    %c0_i32_0 = arith.constant 0 : i32
    return %arg0, %c0_i32, %arg1 : i32, i32, i32
  }
}

</mosaic_0001>

<llo_original>
// kernel: tpu_custom_call.1
$region0: #{tpu_custom_call.1}
  #allocation0 [shape = 'u32[]', space=smem, size = 0x4, offset = 0x4, fixed_abs, tag = 'smem constant byte address 0x4 - core index']
  #allocation1 [shape = 'u32[144,128]{1,0:T(1,128)}', space=vmem, size = 0x12000, scoped, tag = 'internal scratch']
  %s0 = inlined_call_operand.hbm [shape: f32[8,16,128], index: 0, kind: input, shape index: {}]
  %s1 = inlined_call_operand.hbm [shape: f32[8,16,128], index: 1, kind: output, shape index: {}]
  %s2 = sld [smem:[#allocation0]]
  $region41: #{tpu_custom_call.1} parent=0
    _
  %s4 = ssub.s32 1, %s2
  %s5 = scalar_select 0, %s4, %s2
  $region1: #{tpu_custom_call.1} parent=0
    #allocation2 [shape = 'u8[65536]{0}', space=vmem, size = 0x10000, scoped, tag = 'input window, operand 0']
    #allocation3 [shape = 's32[2]{0}', space=sflag, size = 0x8, scoped, tag = 'scoped memory for tpu_custom_call.1']
    #allocation4 [shape = 's32[2]{0}', space=sflag, size = 0x8, scoped, tag = 'scoped memory for tpu_custom_call.1']
    #allocation5 [shape = 'u8[65536]{0}', space=vmem, size = 0x10000, scoped, tag = 'output window, operand 0']
    %6 = vsyncpa [#allocation3], 0
    %s7 = scalar_lea.sflag [#allocation3], 1
    %8 = vsyncpa %s7, 0
    %9 = vsyncpa [#allocation4], 0
    %s10 = scalar_lea.sflag [#allocation4], 1
    %11 = vsyncpa %s10, 0
    loop: start=0, step=1, limit=4
    $region2: #{tpu_custom_call.1} parent=1 // loop_pre_header
      _
    $region3: #{tpu_custom_call.1} parent=1 // loop_header
      %s13 = sphi 0, %s17
      %p14 = scmp.ge.s32.totalorder %s13, 4
      %s20 = sphi 0, %s32
      %s21 = sphi 0, %s28
      %s22 = sphi 0, %s20
      %s23 = sphi 0, %s21
      %s24 = sphi 0, %s22
      %s25 = sphi 0, %s23
      %s37 = sphi 0, %s39
      %s40 = sphi 0, %s37
      %s41 = sphi 0, %s40
      %s57 = sphi 0, %s41
      %s65 = sphi 0, %s67
      %s68 = sphi 0, %s65
      %s69 = sphi 0, %s68
      %s85 = sphi 0, %s69
    $region4: #{tpu_custom_call.1} parent=1 // loop_header_branch
      %16 = sbr.rel (%p14) target = $region8
    $region5: #{tpu_custom_call.1} parent=1 // loop_body
      %s18 = ssub.s32 %s13, 1
      %s19 = ssub.s32 %s13, 2
      %s26 = sadd.s32 1, %s21
      %p27 = scmp.ge.s32.totalorder %s26, 1
      %s28 = scalar_select %p27, 0, %s26
      %s29 = sadd.s32 1, %s20
      %s30 = scalar_select %p27, %s29, %s20
      %p31 = scmp.ge.s32.totalorder %s30, 2
      %s32 = scalar_select %p31, 0, %s30
      %s33 = ssub.s32 %s20, %s32
      %s34 = ssub.s32 %s21, %s28
      %s35 = sor.u32 %s33, %s34
      %p36 = scmp.eq.s32.totalorder %s35, 0
      %s38 = sadd.s32 %s37, 1
      %s39 = scalar_select %p36, %s37, %s38
      %p42 = pneg %p36
      %p43 = scmp.eq.s32.totalorder %s13, 1
      %p44 = por %p42, %p43
      %p45 = scmp.ne.s32.totalorder %s37, %s40
      %p46 = scmp.eq.s32.totalorder %s13, 0
      %p47 = por %p45, %p46
      %p48 = scmp.ne.s32.totalorder %s37, %s40
      %p49 = scmp.eq.s32.totalorder %s18, 1
      %p50 = por %p48, %p49
      %p51 = scmp.ne.s32.totalorder %s40, %s41
      %p52 = scmp.eq.s32.totalorder %s18, 0
      %p53 = por %p51, %p52
      %p54 = scmp.ne.s32.totalorder %s40, %s41
      %p55 = scmp.eq.s32.totalorder %s19, 1
      %p56 = por %p54, %p55
      %p58 = scmp.ne.s32.totalorder %s41, %s57
      %p59 = scmp.eq.s32.totalorder %s19, 0
      %p60 = por %p58, %p59
      %s61 = ssub.s32 %s20, %s32
      %s62 = ssub.s32 %s21, %s28
      %s63 = sor.u32 %s61, %s62
      %p64 = scmp.eq.s32.totalorder %s63, 0
      %s66 = sadd.s32 %s65, 1
      %s67 = scalar_select %p64, %s65, %s66
      %p70 = pneg %p64
      %p71 = scmp.eq.s32.totalorder %s13, 1
      %p72 = por %p70, %p71
      %p73 = scmp.ne.s32.totalorder %s65, %s68
      %p74 = scmp.eq.s32.totalorder %s13, 0
      %p75 = por %p73, %p74
      %p76 = scmp.ne.s32.totalorder %s65, %s68
      %p77 = scmp.eq.s32.totalorder %s18, 1
      %p78 = por %p76, %p77
      %p79 = scmp.ne.s32.totalorder %s68, %s69
      %p80 = scmp.eq.s32.totalorder %s18, 0
      %p81 = por %p79, %p80
      %p82 = scmp.ne.s32.totalorder %s68, %s69
      %p83 = scmp.eq.s32.totalorder %s19, 1
      %p84 = por %p82, %p83
      %p86 = scmp.ne.s32.totalorder %s69, %s85
      %p87 = scmp.eq.s32.totalorder %s19, 0
      %p88 = por %p86, %p87
      %p89 = scmp.le.s32.totalorder 1, %s13
      %p90 = scmp.lt.s32.totalorder %s13, 3
      %p91 = pnand %p89, %p90
      %p92 = pneg %p91
      // Predicated region
      $region9: #{tpu_custom_call.1} parent=5 // pred_check
        _
      $region10: #{tpu_custom_call.1} parent=5 // pred_check_branch
        %94 = sbr.rel (%p91) target = $region12
      $region11: #{tpu_custom_call.1} parent=5 // pred_region
        %s95 = ssub.s32 %s13, 1
      $region12: #{tpu_custom_call.1} parent=5 // pred_fallthru
        _
      %p96 = scmp.lt.s32.totalorder %s13, 2
      // Predicated region
      $region13: #{tpu_custom_call.1} parent=5 // pred_check
        %p97 = pneg %p96
      $region14: #{tpu_custom_call.1} parent=5 // pred_check_branch
        %99 = sbr.rel (%p97) target = $region16
      $region15: #{tpu_custom_call.1} parent=5 // pred_region
        // Predicated region
        $region17: #{tpu_custom_call.1} parent=15 // pred_check
          %p100 = pneg %p47
        $region18: #{tpu_custom_call.1} parent=15 // pred_check_branch
          %102 = sbr.rel (%p100) target = $region20
        $region19: #{tpu_custom_call.1} parent=15 // pred_region
          %s103 = sand.u32 %s37, 1
          %s104 = scalar_lea.sflag [#allocation3], %s103
          %s105 = sand.u32 %s37, 1
          %s106 = smul.addr %s105, 64
          %s107 = scalar_lea.vmem [#allocation2], %s106
          %s108 = smul.u32 4, %s20
          %s110 = ssub.s32 1024, 1024
          %111 = vsyncadd %s104, %s110
          %s112 = smul.addr %s108, 2
          %s113 = sadd.s32 %s21, %s112
          %s114 = smul.addr %s113, 128
          %s115 = scalar_lea.hbm %s0, %s114
          %s116 = sshll.u32 %s107, 4
          %s117 = int_to_ptr.vmem [resolvable:$true] %s116
          %122 = dma.hbm_to_vmem [thread:$0]  %s115, 1024, %s117, %s104, 128, 128, 8
        $region20: #{tpu_custom_call.1} parent=15 // pred_fallthru
          _
      $region16: #{tpu_custom_call.1} parent=5 // pred_fallthru
        _
      %p123 = scmp.le.s32.totalorder 1, %s13
      %p124 = scmp.lt.s32.totalorder %s13, 3
      %p125 = pnand %p123, %p124
      %p126 = pneg %p125
      // Predicated region
      $region21: #{tpu_custom_call.1} parent=5 // pred_check
        _
      $region22: #{tpu_custom_call.1} parent=5 // pred_check_branch
        %128 = sbr.rel (%p125) target = $region24
      $region23: #{tpu_custom_call.1} parent=5 // pred_region
        %s129 = ssub.s32 %s13, 1
        %s130 = sand.u32 %s40, 1
        %s131 = scalar_lea.sflag [#allocation3], %s130
        %s132 = sand.u32 %s40, 1
        %s133 = smul.addr %s132, 64
        %s134 = scalar_lea.vmem [#allocation2], %s133
        // Predicated region
        $region25: #{tpu_custom_call.1} parent=23 // pred_check
          %p135 = pneg %p53
        $region26: #{tpu_custom_call.1} parent=23 // pred_check_branch
          %137 = sbr.rel (%p135) target = $region28
        $region27: #{tpu_custom_call.1} parent=23 // pred_region
          %138 = dma.done %s131, 1024
        $region28: #{tpu_custom_call.1} parent=23 // pred_fallthru
          _
        %s139 = sand.u32 %s40, 1
        %s140 = scalar_lea.sflag [#allocation3], %s139
        %s141 = sand.u32 %s40, 1
        %s142 = smul.addr %s141, 64
        %s143 = scalar_lea.vmem [#allocation2], %s142
        %p144 = pneg %p53
        %p145 = pneg %p50
        %p146 = pneg %p81
        %p147 = pneg %p78
        %s148 = sand.u32 %s68, 1
        %s149 = scalar_lea.sflag [#allocation4], %s148
        %s150 = sand.u32 %s68, 1
        %s151 = smul.addr %s150, 64
        %s152 = scalar_lea.vmem [#allocation5], %s151
        %s153 = smul.u32 4, %s22
        %s154 = smul.u32 4, %s22
        %v155 = vld [vmem:[%s134] sm:$0xff]
        %v156 = vld [vmem:[%s134 + $0x8] sm:$0xff]
        %v157 = vld [vmem:[%s134 + $0x10] sm:$0xff]
        %v158 = vld [vmem:[%s134 + $0x18] sm:$0xff]
        %v159 = vld [vmem:[%s134 + $0x20] sm:$0xff]
        %v160 = vld [vmem:[%s134 + $0x28] sm:$0xff]
        %v161 = vld [vmem:[%s134 + $0x30] sm:$0xff]
        %v162 = vld [vmem:[%s134 + $0x38] sm:$0xff]
        %v163 = vmax.f32 %v155, %v156
        %v164 = vrot.slane %v163, 4
        %v165 = vmax.f32 %v163, %v164
        %v166 = vrot.slane %v165, 2
        %v167 = vmax.f32 %v165, %v166
        %v168 = vrot.slane %v167, 1
        %v169 = vmax.f32 %v167, %v168
        %v170 = vmax.f32 %v157, %v158
        %v171 = vrot.slane %v170, 4
        %v172 = vmax.f32 %v170, %v171
        %v173 = vrot.slane %v172, 2
        %v174 = vmax.f32 %v172, %v173
        %v175 = vrot.slane %v174, 1
        %v176 = vmax.f32 %v174, %v175
        %v177 = vmax.f32 %v159, %v160
        %v178 = vrot.slane %v177, 4
        %v179 = vmax.f32 %v177, %v178
        %v180 = vrot.slane %v179, 2
        %v181 = vmax.f32 %v179, %v180
        %v182 = vrot.slane %v181, 1
        %v183 = vmax.f32 %v181, %v182
        %v184 = vmax.f32 %v161, %v162
        %v185 = vrot.slane %v184, 4
        %v186 = vmax.f32 %v184, %v185
        %v187 = vrot.slane %v186, 2
        %v188 = vmax.f32 %v186, %v187
        %v189 = vrot.slane %v188, 1
        %v190 = vmax.f32 %v188, %v189
        %v191 = vsub.f32 %v155, %v169
        %v192 = vsub.f32 %v156, %v169
        %v193 = vsub.f32 %v157, %v176
        %v194 = vsub.f32 %v158, %v176
        %v195 = vsub.f32 %v159, %v183
        %v196 = vsub.f32 %v160, %v183
        %v197 = vsub.f32 %v161, %v190
        %v198 = vsub.f32 %v162, %v190
        %v199 = vmul.f32 %v191, 0.5
        %v200 = vmul.f32 %v192, 0.5
        %v201 = vmul.f32 %v193, 0.5
        %v202 = vmul.f32 %v194, 0.5
        %v203 = vmul.f32 %v195, 0.5
        %v204 = vmul.f32 %v196, 0.5
        %v205 = vmul.f32 %v197, 0.5
        %v206 = vmul.f32 %v198, 0.5
        %v207 = vmul.f32 %v199, 1.442695
        %v208 = vpow.pop %v207
        %v209 = vmul.f32 %v200, 1.442695
        %v210 = vpow.pop %v209
        %v211 = vmul.f32 %v201, 1.442695
        %v212 = vpow.pop %v211
        %v213 = vmul.f32 %v202, 1.442695
        %v214 = vpow.pop %v213
        %v215 = vmul.f32 %v203, 1.442695
        %v216 = vpow.pop %v215
        %v217 = vmul.f32 %v204, 1.442695
        %v218 = vpow.pop %v217
        %v219 = vmul.f32 %v205, 1.442695
        %v220 = vpow.pop %v219
        %v221 = vmul.f32 %v206, 1.442695
        %v222 = vpow.pop %v221
        %v223 = vadd.f32 %v208, %v210
        %v224 = vrot.slane %v223, 4
        %v225 = vadd.f32 %v223, %v224
        %v226 = vrot.slane %v225, 2
        %v227 = vadd.f32 %v225, %v226
        %v228 = vrot.slane %v227, 1
        %v229 = vadd.f32 %v227, %v228
        %v230 = vadd.f32 %v212, %v214
        %v231 = vrot.slane %v230, 4
        %v232 = vadd.f32 %v230, %v231
        %v233 = vrot.slane %v232, 2
        %v234 = vadd.f32 %v232, %v233
        %v235 = vrot.slane %v234, 1
        %v236 = vadd.f32 %v234, %v235
        %v237 = vadd.f32 %v216, %v218
        %v238 = vrot.slane %v237, 4
        %v239 = vadd.f32 %v237, %v238
        %v240 = vrot.slane %v239, 2
        %v241 = vadd.f32 %v239, %v240
        %v242 = vrot.slane %v241, 1
        %v243 = vadd.f32 %v241, %v242
        %v244 = vadd.f32 %v220, %v222
        %v245 = vrot.slane %v244, 4
        %v246 = vadd.f32 %v244, %v245
        %v247 = vrot.slane %v246, 2
        %v248 = vadd.f32 %v246, %v247
        %v249 = vrot.slane %v248, 1
        %v250 = vadd.f32 %v248, %v249
        %v251 = vrcp.pop %v229
        %v252 = vrcp.pop %v236
        %v253 = vrcp.pop %v243
        %v254 = vrcp.pop %v250
        %v255 = vmul.f32 %v208, %v251
        %v256 = vmul.f32 %v210, %v251
        %v257 = vmul.f32 %v212, %v252
        %v258 = vmul.f32 %v214, %v252
        %v259 = vmul.f32 %v216, %v253
        %v260 = vmul.f32 %v218, %v253
        %v261 = vmul.f32 %v220, %v254
        %v262 = vmul.f32 %v222, %v254
        %263 = vst [vmem:[%s152] sm:$0xff] %v255
        %264 = vst [vmem:[%s152 + $0x8] sm:$0xff] %v256
        %265 = vst [vmem:[%s152 + $0x10] sm:$0xff] %v257
        %266 = vst [vmem:[%s152 + $0x18] sm:$0xff] %v258
        %267 = vst [vmem:[%s152 + $0x20] sm:$0xff] %v259
        %268 = vst [vmem:[%s152 + $0x28] sm:$0xff] %v260
        %269 = vst [vmem:[%s152 + $0x30] sm:$0xff] %v261
        %270 = vst [vmem:[%s152 + $0x38] sm:$0xff] %v262
        %s271 = sand.u32 %s68, 1
        %s272 = scalar_lea.sflag [#allocation4], %s271
        %s273 = sand.u32 %s68, 1
        %s274 = smul.addr %s273, 64
        %s275 = scalar_lea.vmem [#allocation5], %s274
        // Predicated region
        $region29: #{tpu_custom_call.1} parent=23 // pred_check
          %p276 = pneg %p78
        $region30: #{tpu_custom_call.1} parent=23 // pred_check_branch
          %278 = sbr.rel (%p276) target = $region32
        $region31: #{tpu_custom_call.1} parent=23 // pred_region
          %s279 = smul.u32 4, %s22
          %s281 = ssub.s32 1024, 1024
          %282 = vsyncadd %s272, %s281
          %s283 = smul.addr %s279, 2
          %s284 = sadd.s32 %s23, %s283
          %s285 = smul.addr %s284, 128
          %s286 = scalar_lea.hbm %s1, %s285
          %s287 = sshll.u32 %s275, 4
          %s288 = int_to_ptr.vmem [resolvable:$true] %s287
          %293 = dma.vmem_to_hbm [thread:$0]  %s288, 1024, %s286, %s272, 128, 128, 8
        $region32: #{tpu_custom_call.1} parent=23 // pred_fallthru
          _
      $region24: #{tpu_custom_call.1} parent=5 // pred_fallthru
        _
      %p294 = scmp.le.s32.totalorder 2, %s13
      // Predicated region
      $region33: #{tpu_custom_call.1} parent=5 // pred_check
        %p295 = pneg %p294
      $region34: #{tpu_custom_call.1} parent=5 // pred_check_branch
        %297 = sbr.rel (%p295) target = $region36
      $region35: #{tpu_custom_call.1} parent=5 // pred_region
        %s298 = ssub.s32 %s13, 2
        // Predicated region
        $region37: #{tpu_custom_call.1} parent=35 // pred_check
          %p299 = pneg %p84
        $region38: #{tpu_custom_call.1} parent=35 // pred_check_branch
          %301 = sbr.rel (%p299) target = $region40
        $region39: #{tpu_custom_call.1} parent=35 // pred_region
          %s302 = sand.u32 %s69, 1
          %s303 = scalar_lea.sflag [#allocation4], %s302
          %s304 = sand.u32 %s69, 1
          %s305 = smul.addr %s304, 64
          %s306 = scalar_lea.vmem [#allocation5], %s305
          %307 = dma.done %s303, 1024
        $region40: #{tpu_custom_call.1} parent=35 // pred_fallthru
          _
      $region36: #{tpu_custom_call.1} parent=5 // pred_fallthru
        _
    $region6: #{tpu_custom_call.1} parent=1 // loop_footer
      %s17 = sadd.s32 1, %s13
    $region7: #{tpu_custom_call.1} parent=1 // loop_footer_branch
      %12 = sbr.rel target = $region3
    $region8: #{tpu_custom_call.1} parent=1 // loop_exit
      _
    %308 = vsyncpa [#allocation3], 1
    %s309 = scalar_lea.sflag [#allocation3], 1
    %310 = vsyncpa %s309, 1
    %311 = vsyncpa [#allocation4], 1
    %s312 = scalar_lea.sflag [#allocation4], 1
    %313 = vsyncpa %s312, 1

</llo_original>
